<compile_context>
chip_gen: v5e
topology: v5e:2x2
jax: 0.10.0
libtpu: 0.0.40
codegen_flags: <defaults>
</compile_context>

<pallas_src>
import math
import functools

import jax
import jax.numpy as jnp
from jax.experimental import pallas as pl
from jax.experimental.pallas import tpu as pltpu


HYPER_TILE = 1024     # row/col tile for the adjacency matmul
LINE_TL = 16          # L-tile for the streamed line-graph kernel


def _round_up(x, m):
    return ((x + m - 1) // m) * m


# ----------------------------------------------------------------------------
# One-time graph preprocessing (call OUTSIDE the jitted forward):
# pad the densified adjacency to a tile multiple and cast to bf16.
# ----------------------------------------------------------------------------
def prepare_adjacency(adjacency, max_tile=HYPER_TILE):
    # TODO(synk): real DHCN uses a sparse N x N adjacency; densifying is O(N^2) memory.
    N = adjacency.shape[0]
    Np0 = _round_up(N, 128)
    Np = Np0 if Np0 <= max_tile else _round_up(N, max_tile)
    if Np != N:
        adjacency = jnp.pad(adjacency, ((0, Np - N), (0, Np - N)))
    return adjacency.astype(jnp.bfloat16)


# ----------------------------------------------------------------------------
# Kernel 1 (fused, streamed): line-graph adjacency DA + LineConv.
# Grid axis = L tiles.  Per step: accumulate int32 overlap and the masked hidden
# sum; final step builds A/DA and runs the LineConv step matmuls.
# Reproduces (PyTorch broadcast quirk preserved):
#   overlap[i,j] = sum_t [seq[i,t]==seq[j,t] and mask[i,t] and mask[j,t]]
#   A  = overlap / (2*len_j - overlap) + I
#   DA = A / A.sum(1, keepdims=True)
#   s  = masked mean over seq positions of hidden
#   out = mean over {s, DA@s, DA@(DA@s), ...}     (steps+1 terms)
# ----------------------------------------------------------------------------
def line_fused_kernel(si_ref, sjt_ref, mask_ref, hidden_ref, out_ref,
                      ov_ref, s_ref, *, steps):
    l = pl.program_id(0)

    @pl.when(l == 0)
    def _():
        ov_ref[...] = jnp.zeros_like(ov_ref)
        s_ref[...] = jnp.zeros_like(s_ref)

    si = si_ref[0]          # (B, tl) int32, invalid positions -> -1
    sjt = sjt_ref[0]        # (tl, B) int32, invalid positions -> -2
    m = mask_ref[0]         # (B, tl) float32
    h = hidden_ref[...]     # (B, tl, Dp) float32
    tl = si.shape[1]

    # Position-aligned overlap for this L tile: L cheap (B,1)x(1,B) broadcast
    # compares, accumulated locally in int32 (single f32 cast at the very end).
    # TODO(synk): for large B (>=256) block this over (8k,128) tiles of the (B,B)
    # matrix (outer loop over tiles, inner over t) so the running tile stays in vregs,
    # and give the streamed s-reduction a parallel B-row grid axis for v7x's 2 TCs.
    ov = (si[:, 0:1] == sjt[0:1, :]).astype(jnp.int32)
    for t in range(1, tl):                       # tl is static -> unrolled
        ov = ov + (si[:, t:t + 1] == sjt[t:t + 1, :]).astype(jnp.int32)
    ov_ref[...] += ov

    # Masked hidden sum for this L tile.
    s_ref[...] += jnp.sum(h * m[:, :, None], axis=1)

    @pl.when(l == pl.num_programs(0) - 1)
    def _():
        overlap = ov_ref[...].astype(jnp.float32)                 # (B, B)
        Bq = overlap.shape[0]
        eye = (jax.lax.broadcasted_iota(jnp.int32, (Bq, Bq), 0)
               == jax.lax.broadcasted_iota(jnp.int32, (Bq, Bq), 1)).astype(jnp.float32)
        # Masked positions can never match (ids -1 vs -2), so the overlap diagonal
        # equals the per-session valid length; read lens from it in both layouts.
        lens_row = jnp.sum(overlap * eye, axis=0, keepdims=True)  # (1, B)
        lens_col = jnp.sum(overlap * eye, axis=1, keepdims=True)  # (B, 1)

        # Exact divisions (no approx reciprocal) to stay close to the torch reference.
        A = overlap / (2.0 * lens_row - overlap) + eye
        da = A / jnp.sum(A, axis=1, keepdims=True)                # (B, B)
        s = s_ref[...] / lens_col                                 # (B, Dp) masked mean
        # NOTE: lens==0 (fully padded session) yields NaN, matching the torch reference.

        acc = s
        cur = s
        for _ in range(steps):
            cur = jnp.dot(da, cur, preferred_element_type=jnp.float32)
            acc = acc + cur
        out_ref[...] = acc * (1.0 / float(steps + 1))


def line_conv_fused(si3, sjt3, m3, hidden_p, steps):
    nT, B, tl = si3.shape
    _, Lp, Dp = hidden_p.shape
    return pl.pallas_call(
        functools.partial(line_fused_kernel, steps=steps),
        out_shape=jax.ShapeDtypeStruct((B, Dp), jnp.float32),
        grid_spec=pltpu.PrefetchScalarGridSpec(
            num_scalar_prefetch=0,
            grid=(nT,),
            in_specs=[pl.BlockSpec((1, B, tl), lambda l: (l, 0, 0)),
                      pl.BlockSpec((1, tl, B), lambda l: (l, 0, 0)),
                      pl.BlockSpec((1, B, tl), lambda l: (l, 0, 0)),
                      pl.BlockSpec((B, tl, Dp), lambda l: (0, l, 0))],
            out_specs=pl.BlockSpec((B, Dp), lambda l: (0, 0)),
            scratch_shapes=[pltpu.VMEM((B, B), jnp.int32),
                            pltpu.VMEM((B, Dp), jnp.float32)]),
        compiler_params=pltpu.CompilerParams(
            dimension_semantics=("arbitrary",)),
    )(si3, sjt3, m3, hidden_p)


# ----------------------------------------------------------------------------
# Kernel 2: one HyperConv step with fused mean-accumulation epilogue.
#   cur_new = adjacency @ cur          (bf16 streams, f32 accumulate)
#   acc_new = acc_prev + cur_new       (fused into the finalize branch)
# grid = (rows, k); adjacency streamed tile-by-tile, (tk,Dp) cur slab and the
# (tm,Dp) accumulator resident per row tile.
# ----------------------------------------------------------------------------
def hyper_step_kernel(adj_ref, x_ref, accprev_ref, cur_ref, acc_out_ref, acc_ref):
    @pl.when(pl.program_id(1) == 0)
    def _():
        acc_ref[...] = jnp.zeros_like(acc_ref)

    acc_ref[...] += jnp.dot(adj_ref[...], x_ref[...],
                            preferred_element_type=jnp.float32)

    @pl.when(pl.program_id(1) == pl.num_programs(1) - 1)
    def _():
        cur_ref[...] = acc_ref[...].astype(cur_ref.dtype)        # bf16 for next step
        acc_out_ref[...] = accprev_ref[...] + acc_ref[...]       # fused running sum


def _adj_matmul_step(adj, cur, acc_prev, tm, tk):
    Np, Dp = acc_prev.shape
    grid = (Np // tm, Np // tk)
    return pl.pallas_call(
        hyper_step_kernel,
        out_shape=(jax.ShapeDtypeStruct((Np, Dp), jnp.bfloat16),
                   jax.ShapeDtypeStruct((Np, Dp), jnp.float32)),
        grid_spec=pltpu.PrefetchScalarGridSpec(
            num_scalar_prefetch=0,
            grid=grid,
            in_specs=[pl.BlockSpec((tm, tk), lambda i, k: (i, k)),
                      pl.BlockSpec((tk, Dp), lambda i, k: (k, 0)),
                      pl.BlockSpec((tm, Dp), lambda i, k: (i, 0))],
            out_specs=[pl.BlockSpec((tm, Dp), lambda i, k: (i, 0)),
                       pl.BlockSpec((tm, Dp), lambda i, k: (i, 0))],
            scratch_shapes=[pltpu.VMEM((tm, Dp), jnp.float32)]),
        compiler_params=pltpu.CompilerParams(
            dimension_semantics=("parallel", "arbitrary"),
            vmem_limit_bytes=48 * 1024 * 1024),
    )(adj, cur, acc_prev)


def hyper_conv(adj_p, emb_rp, steps):
    """HyperConv.forward; adj_p is the pre-padded bf16 adjacency, emb_rp is (Np, Dp) f32."""
    Np = adj_p.shape[0]
    tile = HYPER_TILE if Np > HYPER_TILE else Np   # prepare_adjacency guarantees Np % tile == 0
    acc = emb_rp                                   # f32 running sum (starts at hidden)
    cur = emb_rp.astype(jnp.bfloat16)              # bf16 stream operand
    for _ in range(steps):                         # true dependency -> one streamed matmul per step
        cur, acc = _adj_matmul_step(adj_p, cur, acc, tile, tile)
    return acc * (1.0 / float(steps + 1))          # (Np, Dp)


# ----------------------------------------------------------------------------
# DHCN.forward (single SEQUENCE key, eval mode => dropout is identity)
# ----------------------------------------------------------------------------
def dhcn_forward(emb_weight, adj_prepped, input_seq, mask, items, n_iter=1):
    """Returns (h_lg, h_local, h_global) matching DHCN.forward output[SEQUENCE]."""
    N, D = emb_weight.shape
    Dp = _round_up(D, 128)                                   # lane-dense hidden dim
    Np = adj_prepped.shape[0]
    B, L = input_seq.shape

    emb_cp = jnp.pad(emb_weight, ((0, 0), (0, Dp - D))) if Dp != D else emb_weight

    # ---- line-graph branch (streamed over L tiles) ----
    tl = LINE_TL
    Lp = _round_up(L, tl)
    if Lp != L:
        pad = ((0, 0), (0, Lp - L))
        seq_p = jnp.pad(input_seq, pad)
        mask_p = jnp.pad(mask, pad)
        items_p = jnp.pad(items, pad)
    else:
        seq_p, mask_p, items_p = input_seq, mask, items

    seq_i32 = seq_p.astype(jnp.int32)
    mask_f = mask_p.astype(jnp.float32)                      # (B, Lp)
    si = jnp.where(mask_p, seq_i32, -1)                      # (B, Lp)
    sjt = jnp.where(mask_p, seq_i32, -2).T                   # (Lp, B)

    nT = Lp // tl
    si3 = si.reshape(B, nT, tl).transpose(1, 0, 2)           # (nT, B, tl)
    m3 = mask_f.reshape(B, nT, tl).transpose(1, 0, 2)        # (nT, B, tl)
    sjt3 = sjt.reshape(nT, tl, B)                            # (nT, tl, B)

    # h_local (pre-hyperconv) = mean over the single embedding key == lookup of `items`
    h_graph_p = jnp.take(emb_cp, items_p, axis=0)            # (B, Lp, Dp) -- glue gather

    # Fused DA construction + LineConv (Pallas kernel 1); dropout_local skipped (eval)
    h_lg_p = line_conv_fused(si3, sjt3, m3, h_graph_p, n_iter)   # (B, Dp)

    # ---- hyper-graph branch ----
    emb_rp = jnp.pad(emb_cp, ((0, Np - N), (0, 0))) if Np != N else emb_cp
    h_global_p = hyper_conv(adj_prepped, emb_rp, n_iter)[:N]     # (N, Dp)

    # h_local = F.embedding(items, h_global)  -- glue gather
    h_local_p = jnp.take(h_global_p, items, axis=0)              # (B, L, Dp)

    return h_lg_p[:, :D], h_local_p[..., :D], h_global_p[:, :D]


if __name__ == "__main__":
    # Small, deterministic synthetic configuration
    B, L, D, N = 8, 8, 32, 64       # batch, max_len, hidden_dim, n_nodes
    N_ITER = 1

    key = jax.random.PRNGKey(0)
    k_emb, k_adj, k_seq, k_items, k_len = jax.random.split(key, 5)

    # Parameter init mimicking DHCN.reset_parameters: uniform(-stdv, stdv)
    stdv = 1.0 / math.sqrt(D)
    emb_weight = jax.random.uniform(
        k_emb, (N, D), minval=-stdv, maxval=stdv, dtype=jnp.float32)

    # Synthetic dense (densified sparse) hypergraph adjacency, deterministic
    adjacency = jax.random.uniform(k_adj, (N, N), dtype=jnp.float32) * 0.1
    adj_prepped = prepare_adjacency(adjacency)               # one-time preprocessing, outside jit

    # Synthetic session data: item ids in [1, N), "items" row indices, valid-length mask
    input_seq = jax.random.randint(k_seq, (B, L), 1, N, dtype=jnp.int32)
    items = jax.random.randint(k_items, (B, L), 1, N, dtype=jnp.int32)
    lengths = jax.random.randint(k_len, (B,), 2, L + 1, dtype=jnp.int32)
    pos = jnp.arange(L, dtype=jnp.int32)[None, :]
    mask = pos < lengths[:, None]                            # (B, L) bool, >=2 valid each

    fwd = jax.jit(functools.partial(dhcn_forward, n_iter=N_ITER))
    h_lg, h_local, h_global = fwd(emb_weight, adj_prepped, input_seq, mask, items)
    jax.block_until_ready((h_lg, h_local, h_global))

    assert h_lg.shape == (B, D)
    assert h_local.shape == (B, L, D)
    assert h_global.shape == (N, D)
    assert jnp.all(jnp.isfinite(h_lg)) and jnp.all(jnp.isfinite(h_global))
    print("KERNEL_OK")
</pallas_src>

<mosaic_0001>
module attributes {stable_mosaic.version = 11 : i64} {
  func.func @line_fused_kernel(%arg0: i32, %arg1: memref<1x8x16xi32, #tpu.memory_space<vmem>>, %arg2: memref<1x16x8xi32, #tpu.memory_space<vmem>>, %arg3: memref<1x8x16xf32, #tpu.memory_space<vmem>>, %arg4: memref<8x16x128xf32, #tpu.memory_space<vmem>>, %arg5: memref<8x128xf32, #tpu.memory_space<vmem>>, %arg6: memref<8x8xi32, #tpu.memory_space<vmem>>, %arg7: memref<8x128xf32, #tpu.memory_space<vmem>>) attributes {dimension_semantics = [#tpu.dimension_semantics<arbitrary>], iteration_bounds = array<i64: 1>, scalar_prefetch = 0 : i64, scratch_operands = 2 : i64, tpu.core_type = #tpu.core_type<tc>, window_params = [{transform_indices = @transform_0, window_bounds = array<i64: 1, 8, 16>}, {transform_indices = @transform_1, window_bounds = array<i64: 1, 16, 8>}, {transform_indices = @transform_2, window_bounds = array<i64: 1, 8, 16>}, {transform_indices = @transform_3, window_bounds = array<i64: 8, 16, 128>}, {pipeline_mode = #tpu.pipeline_mode<synchronous>, transform_indices = @transform_4, window_bounds = array<i64: 8, 128>}]} {
    %c0_i32 = arith.constant 0 : i32
    %0 = arith.cmpi eq, %arg0, %c0_i32 : i32
    %1 = arith.extui %0 : i1 to i32
    %c0_i32_0 = arith.constant 0 : i32
    %2 = arith.cmpi ne, %1, %c0_i32_0 : i32
    scf.if %2 {
      %c0_i32_22 = arith.constant 0 : i32
      %134 = vector.broadcast %c0_i32_22 : i32 to vector<8x8xi32>
      %c0_23 = arith.constant 0 : index
      %c0_24 = arith.constant 0 : index
      %135 = vector.load %arg6[%c0_23, %c0_24] : memref<8x8xi32, #tpu.memory_space<vmem>>, vector<8x8xi32>
      tpu.vector_store %arg6[%c0_23, %c0_24], %134 {strides = array<i32>} : memref<8x8xi32, #tpu.memory_space<vmem>>, vector<8x8xi32>,
      %cst_25 = arith.constant 0.000000e+00 : f32
      %136 = vector.broadcast %cst_25 : f32 to vector<8x128xf32>
      %c0_26 = arith.constant 0 : index
      %c0_27 = arith.constant 0 : index
      %137 = vector.load %arg7[%c0_26, %c0_27] : memref<8x128xf32, #tpu.memory_space<vmem>>, vector<8x128xf32>
      tpu.vector_store %arg7[%c0_26, %c0_27], %136 {strides = array<i32>} : memref<8x128xf32, #tpu.memory_space<vmem>>, vector<8x128xf32>,
    } else {
    }
    %c0 = arith.constant 0 : index
    %c0_1 = arith.constant 0 : index
    %c0_2 = arith.constant 0 : index
    %3 = vector.load %arg1[%c0, %c0_1, %c0_2] : memref<1x8x16xi32, #tpu.memory_space<vmem>>, vector<1x8x16xi32>
    %4 = vector.shape_cast %3 : vector<1x8x16xi32> to vector<8x16xi32>
    %c0_3 = arith.constant 0 : index
    %c0_4 = arith.constant 0 : index
    %c0_5 = arith.constant 0 : index
    %5 = vector.load %arg2[%c0_3, %c0_4, %c0_5] : memref<1x16x8xi32, #tpu.memory_space<vmem>>, vector<1x16x8xi32>
    %6 = vector.shape_cast %5 : vector<1x16x8xi32> to vector<16x8xi32>
    %c0_6 = arith.constant 0 : index
    %c0_7 = arith.constant 0 : index
    %c0_8 = arith.constant 0 : index
    %7 = vector.load %arg3[%c0_6, %c0_7, %c0_8] : memref<1x8x16xf32, #tpu.memory_space<vmem>>, vector<1x8x16xf32>
    %8 = vector.shape_cast %7 : vector<1x8x16xf32> to vector<8x16xf32>
    %c0_9 = arith.constant 0 : index
    %c0_10 = arith.constant 0 : index
    %c0_11 = arith.constant 0 : index
    %9 = vector.load %arg4[%c0_9, %c0_10, %c0_11] : memref<8x16x128xf32, #tpu.memory_space<vmem>>, vector<8x16x128xf32>
    %10 = vector.extract_strided_slice %4 {offsets = [0, 0], sizes = [8, 1], strides = [1, 1]} : vector<8x16xi32> to vector<8x1xi32>
    %11 = vector.extract_strided_slice %6 {offsets = [0, 0], sizes = [1, 8], strides = [1, 1]} : vector<16x8xi32> to vector<1x8xi32>
    %12 = vector.broadcast %10 : vector<8x1xi32> to vector<8x8xi32>
    %13 = vector.broadcast %11 : vector<1x8xi32> to vector<8x8xi32>
    %14 = arith.cmpi eq, %12, %13 : vector<8x8xi32>
    %15 = arith.extui %14 : vector<8x8xi1> to vector<8x8xi32>
    %16 = vector.extract_strided_slice %4 {offsets = [0, 1], sizes = [8, 1], strides = [1, 1]} : vector<8x16xi32> to vector<8x1xi32>
    %17 = vector.extract_strided_slice %6 {offsets = [1, 0], sizes = [1, 8], strides = [1, 1]} : vector<16x8xi32> to vector<1x8xi32>
    %18 = vector.broadcast %16 : vector<8x1xi32> to vector<8x8xi32>
    %19 = vector.broadcast %17 : vector<1x8xi32> to vector<8x8xi32>
    %20 = arith.cmpi eq, %18, %19 : vector<8x8xi32>
    %21 = arith.extui %20 : vector<8x8xi1> to vector<8x8xi32>
    %22 = arith.addi %15, %21 : vector<8x8xi32>
    %23 = vector.extract_strided_slice %4 {offsets = [0, 2], sizes = [8, 1], strides = [1, 1]} : vector<8x16xi32> to vector<8x1xi32>
    %24 = vector.extract_strided_slice %6 {offsets = [2, 0], sizes = [1, 8], strides = [1, 1]} : vector<16x8xi32> to vector<1x8xi32>
    %25 = vector.broadcast %23 : vector<8x1xi32> to vector<8x8xi32>
    %26 = vector.broadcast %24 : vector<1x8xi32> to vector<8x8xi32>
    %27 = arith.cmpi eq, %25, %26 : vector<8x8xi32>
    %28 = arith.extui %27 : vector<8x8xi1> to vector<8x8xi32>
    %29 = arith.addi %22, %28 : vector<8x8xi32>
    %30 = vector.extract_strided_slice %4 {offsets = [0, 3], sizes = [8, 1], strides = [1, 1]} : vector<8x16xi32> to vector<8x1xi32>
    %31 = vector.extract_strided_slice %6 {offsets = [3, 0], sizes = [1, 8], strides = [1, 1]} : vector<16x8xi32> to vector<1x8xi32>
    %32 = vector.broadcast %30 : vector<8x1xi32> to vector<8x8xi32>
    %33 = vector.broadcast %31 : vector<1x8xi32> to vector<8x8xi32>
    %34 = arith.cmpi eq, %32, %33 : vector<8x8xi32>
    %35 = arith.extui %34 : vector<8x8xi1> to vector<8x8xi32>
    %36 = arith.addi %29, %35 : vector<8x8xi32>
    %37 = vector.extract_strided_slice %4 {offsets = [0, 4], sizes = [8, 1], strides = [1, 1]} : vector<8x16xi32> to vector<8x1xi32>
    %38 = vector.extract_strided_slice %6 {offsets = [4, 0], sizes = [1, 8], strides = [1, 1]} : vector<16x8xi32> to vector<1x8xi32>
    %39 = vector.broadcast %37 : vector<8x1xi32> to vector<8x8xi32>
    %40 = vector.broadcast %38 : vector<1x8xi32> to vector<8x8xi32>
    %41 = arith.cmpi eq, %39, %40 : vector<8x8xi32>
    %42 = arith.extui %41 : vector<8x8xi1> to vector<8x8xi32>
    %43 = arith.addi %36, %42 : vector<8x8xi32>
    %44 = vector.extract_strided_slice %4 {offsets = [0, 5], sizes = [8, 1], strides = [1, 1]} : vector<8x16xi32> to vector<8x1xi32>
    %45 = vector.extract_strided_slice %6 {offsets = [5, 0], sizes = [1, 8], strides = [1, 1]} : vector<16x8xi32> to vector<1x8xi32>
    %46 = vector.broadcast %44 : vector<8x1xi32> to vector<8x8xi32>
    %47 = vector.broadcast %45 : vector<1x8xi32> to vector<8x8xi32>
    %48 = arith.cmpi eq, %46, %47 : vector<8x8xi32>
    %49 = arith.extui %48 : vector<8x8xi1> to vector<8x8xi32>
    %50 = arith.addi %43, %49 : vector<8x8xi32>
    %51 = vector.extract_strided_slice %4 {offsets = [0, 6], sizes = [8, 1], strides = [1, 1]} : vector<8x16xi32> to vector<8x1xi32>
    %52 = vector.extract_strided_slice %6 {offsets = [6, 0], sizes = [1, 8], strides = [1, 1]} : vector<16x8xi32> to vector<1x8xi32>
    %53 = vector.broadcast %51 : vector<8x1xi32> to vector<8x8xi32>
    %54 = vector.broadcast %52 : vector<1x8xi32> to vector<8x8xi32>
    %55 = arith.cmpi eq, %53, %54 : vector<8x8xi32>
    %56 = arith.extui %55 : vector<8x8xi1> to vector<8x8xi32>
    %57 = arith.addi %50, %56 : vector<8x8xi32>
    %58 = vector.extract_strided_slice %4 {offsets = [0, 7], sizes = [8, 1], strides = [1, 1]} : vector<8x16xi32> to vector<8x1xi32>
    %59 = vector.extract_strided_slice %6 {offsets = [7, 0], sizes = [1, 8], strides = [1, 1]} : vector<16x8xi32> to vector<1x8xi32>
    %60 = vector.broadcast %58 : vector<8x1xi32> to vector<8x8xi32>
    %61 = vector.broadcast %59 : vector<1x8xi32> to vector<8x8xi32>
    %62 = arith.cmpi eq, %60, %61 : vector<8x8xi32>
    %63 = arith.extui %62 : vector<8x8xi1> to vector<8x8xi32>
    %64 = arith.addi %57, %63 : vector<8x8xi32>
    %65 = vector.extract_strided_slice %4 {offsets = [0, 8], sizes = [8, 1], strides = [1, 1]} : vector<8x16xi32> to vector<8x1xi32>
    %66 = vector.extract_strided_slice %6 {offsets = [8, 0], sizes = [1, 8], strides = [1, 1]} : vector<16x8xi32> to vector<1x8xi32>
    %67 = vector.broadcast %65 : vector<8x1xi32> to vector<8x8xi32>
    %68 = vector.broadcast %66 : vector<1x8xi32> to vector<8x8xi32>
    %69 = arith.cmpi eq, %67, %68 : vector<8x8xi32>
    %70 = arith.extui %69 : vector<8x8xi1> to vector<8x8xi32>
    %71 = arith.addi %64, %70 : vector<8x8xi32>
    %72 = vector.extract_strided_slice %4 {offsets = [0, 9], sizes = [8, 1], strides = [1, 1]} : vector<8x16xi32> to vector<8x1xi32>
    %73 = vector.extract_strided_slice %6 {offsets = [9, 0], sizes = [1, 8], strides = [1, 1]} : vector<16x8xi32> to vector<1x8xi32>
    %74 = vector.broadcast %72 : vector<8x1xi32> to vector<8x8xi32>
    %75 = vector.broadcast %73 : vector<1x8xi32> to vector<8x8xi32>
    %76 = arith.cmpi eq, %74, %75 : vector<8x8xi32>
    %77 = arith.extui %76 : vector<8x8xi1> to vector<8x8xi32>
    %78 = arith.addi %71, %77 : vector<8x8xi32>
    %79 = vector.extract_strided_slice %4 {offsets = [0, 10], sizes = [8, 1], strides = [1, 1]} : vector<8x16xi32> to vector<8x1xi32>
    %80 = vector.extract_strided_slice %6 {offsets = [10, 0], sizes = [1, 8], strides = [1, 1]} : vector<16x8xi32> to vector<1x8xi32>
    %81 = vector.broadcast %79 : vector<8x1xi32> to vector<8x8xi32>
    %82 = vector.broadcast %80 : vector<1x8xi32> to vector<8x8xi32>
    %83 = arith.cmpi eq, %81, %82 : vector<8x8xi32>
    %84 = arith.extui %83 : vector<8x8xi1> to vector<8x8xi32>
    %85 = arith.addi %78, %84 : vector<8x8xi32>
    %86 = vector.extract_strided_slice %4 {offsets = [0, 11], sizes = [8, 1], strides = [1, 1]} : vector<8x16xi32> to vector<8x1xi32>
    %87 = vector.extract_strided_slice %6 {offsets = [11, 0], sizes = [1, 8], strides = [1, 1]} : vector<16x8xi32> to vector<1x8xi32>
    %88 = vector.broadcast %86 : vector<8x1xi32> to vector<8x8xi32>
    %89 = vector.broadcast %87 : vector<1x8xi32> to vector<8x8xi32>
    %90 = arith.cmpi eq, %88, %89 : vector<8x8xi32>
    %91 = arith.extui %90 : vector<8x8xi1> to vector<8x8xi32>
    %92 = arith.addi %85, %91 : vector<8x8xi32>
    %93 = vector.extract_strided_slice %4 {offsets = [0, 12], sizes = [8, 1], strides = [1, 1]} : vector<8x16xi32> to vector<8x1xi32>
    %94 = vector.extract_strided_slice %6 {offsets = [12, 0], sizes = [1, 8], strides = [1, 1]} : vector<16x8xi32> to vector<1x8xi32>
    %95 = vector.broadcast %93 : vector<8x1xi32> to vector<8x8xi32>
    %96 = vector.broadcast %94 : vector<1x8xi32> to vector<8x8xi32>
    %97 = arith.cmpi eq, %95, %96 : vector<8x8xi32>
    %98 = arith.extui %97 : vector<8x8xi1> to vector<8x8xi32>
    %99 = arith.addi %92, %98 : vector<8x8xi32>
    %100 = vector.extract_strided_slice %4 {offsets = [0, 13], sizes = [8, 1], strides = [1, 1]} : vector<8x16xi32> to vector<8x1xi32>
    %101 = vector.extract_strided_slice %6 {offsets = [13, 0], sizes = [1, 8], strides = [1, 1]} : vector<16x8xi32> to vector<1x8xi32>
    %102 = vector.broadcast %100 : vector<8x1xi32> to vector<8x8xi32>
    %103 = vector.broadcast %101 : vector<1x8xi32> to vector<8x8xi32>
    %104 = arith.cmpi eq, %102, %103 : vector<8x8xi32>
    %105 = arith.extui %104 : vector<8x8xi1> to vector<8x8xi32>
    %106 = arith.addi %99, %105 : vector<8x8xi32>
    %107 = vector.extract_strided_slice %4 {offsets = [0, 14], sizes = [8, 1], strides = [1, 1]} : vector<8x16xi32> to vector<8x1xi32>
    %108 = vector.extract_strided_slice %6 {offsets = [14, 0], sizes = [1, 8], strides = [1, 1]} : vector<16x8xi32> to vector<1x8xi32>
    %109 = vector.broadcast %107 : vector<8x1xi32> to vector<8x8xi32>
    %110 = vector.broadcast %108 : vector<1x8xi32> to vector<8x8xi32>
    %111 = arith.cmpi eq, %109, %110 : vector<8x8xi32>
    %112 = arith.extui %111 : vector<8x8xi1> to vector<8x8xi32>
    %113 = arith.addi %106, %112 : vector<8x8xi32>
    %114 = vector.extract_strided_slice %4 {offsets = [0, 15], sizes = [8, 1], strides = [1, 1]} : vector<8x16xi32> to vector<8x1xi32>
    %115 = vector.extract_strided_slice %6 {offsets = [15, 0], sizes = [1, 8], strides = [1, 1]} : vector<16x8xi32> to vector<1x8xi32>
    %116 = vector.broadcast %114 : vector<8x1xi32> to vector<8x8xi32>
    %117 = vector.broadcast %115 : vector<1x8xi32> to vector<8x8xi32>
    %118 = arith.cmpi eq, %116, %117 : vector<8x8xi32>
    %119 = arith.extui %118 : vector<8x8xi1> to vector<8x8xi32>
    %120 = arith.addi %113, %119 : vector<8x8xi32>
    %c0_12 = arith.constant 0 : index
    %c0_13 = arith.constant 0 : index
    %121 = vector.load %arg6[%c0_12, %c0_13] : memref<8x8xi32, #tpu.memory_space<vmem>>, vector<8x8xi32>
    %122 = arith.addi %121, %120 : vector<8x8xi32>
    %c0_14 = arith.constant 0 : index
    %c0_15 = arith.constant 0 : index
    %123 = vector.load %arg6[%c0_14, %c0_15] : memref<8x8xi32, #tpu.memory_space<vmem>>, vector<8x8xi32>
    tpu.vector_store %arg6[%c0_14, %c0_15], %122 {strides = array<i32>} : memref<8x8xi32, #tpu.memory_space<vmem>>, vector<8x8xi32>,
    %c0_16 = arith.constant 0 : index
    %c0_17 = arith.constant 0 : index
    %124 = vector.load %arg7[%c0_16, %c0_17] : memref<8x128xf32, #tpu.memory_space<vmem>>, vector<8x128xf32>
    %125 = vector.shape_cast %8 : vector<8x16xf32> to vector<8x16x1xf32>
    %126 = vector.broadcast %125 : vector<8x16x1xf32> to vector<8x16x128xf32>
    %127 = arith.mulf %9, %126 : vector<8x16x128xf32>
    %cst = arith.constant dense<0.000000e+00> : vector<8x128xf32>
    %128 = vector.multi_reduction <add>, %127, %cst [1] : vector<8x16x128xf32> to vector<8x128xf32>
    %129 = arith.addf %124, %128 : vector<8x128xf32>
    %c0_18 = arith.constant 0 : index
    %c0_19 = arith.constant 0 : index
    %130 = vector.load %arg7[%c0_18, %c0_19] : memref<8x128xf32, #tpu.memory_space<vmem>>, vector<8x128xf32>
    tpu.vector_store %arg7[%c0_18, %c0_19], %129 {strides = array<i32>} : memref<8x128xf32, #tpu.memory_space<vmem>>, vector<8x128xf32>,
    %c0_i32_20 = arith.constant 0 : i32
    %131 = arith.cmpi eq, %arg0, %c0_i32_20 : i32
    %132 = arith.extui %131 : i1 to i32
    %c0_i32_21 = arith.constant 0 : i32
    %133 = arith.cmpi ne, %132, %c0_i32_21 : i32
    scf.if %133 {
      %c0_22 = arith.constant 0 : index
      %c0_23 = arith.constant 0 : index
      %134 = vector.load %arg6[%c0_22, %c0_23] : memref<8x8xi32, #tpu.memory_space<vmem>>, vector<8x8xi32>
      %135 = arith.sitofp %134 : vector<8x8xi32> to vector<8x8xf32>
      %136 = tpu.iota {dimensions = array<i32: 0>} : vector<8x8xi32>
      %137 = tpu.iota {dimensions = array<i32: 1>} : vector<8x8xi32>
      %138 = arith.cmpi eq, %136, %137 : vector<8x8xi32>
      %139 = arith.extui %138 : vector<8x8xi1> to vector<8x8xi32>
      %140 = arith.sitofp %139 : vector<8x8xi32> to vector<8x8xf32>
      %141 = arith.mulf %135, %140 : vector<8x8xf32>
      %cst_24 = arith.constant dense<0.000000e+00> : vector<8xf32>
      %142 = vector.multi_reduction <add>, %141, %cst_24 [0] : vector<8x8xf32> to vector<8xf32>
      %143 = vector.shape_cast %142 : vector<8xf32> to vector<1x8xf32>
      %144 = arith.mulf %135, %140 : vector<8x8xf32>
      %cst_25 = arith.constant dense<0.000000e+00> : vector<8xf32>
      %145 = vector.multi_reduction <add>, %144, %cst_25 [1] : vector<8x8xf32> to vector<8xf32>
      %146 = vector.shape_cast %145 : vector<8xf32> to vector<8x1xf32>
      %cst_26 = arith.constant 2.000000e+00 : f32
      %147 = vector.broadcast %cst_26 : f32 to vector<1x8xf32>
      %148 = arith.mulf %147, %143 : vector<1x8xf32>
      %149 = vector.broadcast %148 : vector<1x8xf32> to vector<8x8xf32>
      %150 = arith.subf %149, %135 : vector<8x8xf32>
      %151 = arith.divf %135, %150 : vector<8x8xf32>
      %152 = arith.addf %151, %140 : vector<8x8xf32>
      %cst_27 = arith.constant dense<0.000000e+00> : vector<8xf32>
      %153 = vector.multi_reduction <add>, %152, %cst_27 [1] : vector<8x8xf32> to vector<8xf32>
      %154 = vector.shape_cast %153 : vector<8xf32> to vector<8x1xf32>
      %155 = vector.broadcast %154 : vector<8x1xf32> to vector<8x8xf32>
      %156 = arith.divf %152, %155 : vector<8x8xf32>
      %c0_28 = arith.constant 0 : index
      %c0_29 = arith.constant 0 : index
      %157 = vector.load %arg7[%c0_28, %c0_29] : memref<8x128xf32, #tpu.memory_space<vmem>>, vector<8x128xf32>
      %158 = vector.broadcast %146 : vector<8x1xf32> to vector<8x128xf32>
      %159 = arith.divf %157, %158 : vector<8x128xf32>
      %cst_30 = arith.constant dense<0.000000e+00> : vector<8x128xf32>
      %160 = tpu.matmul %156, %159, %cst_30 {dimension_numbers = #tpu.dot_dimension_numbers<[1], [0], [0], [1], [0, 0, 1, 1], [], []>} : vector<8x8xf32>, vector<8x128xf32>, vector<8x128xf32> -> vector<8x128xf32>
      %161 = arith.addf %159, %160 : vector<8x128xf32>
      %cst_31 = arith.constant 5.000000e-01 : f32
      %162 = vector.broadcast %cst_31 : f32 to vector<8x128xf32>
      %163 = arith.mulf %161, %162 : vector<8x128xf32>
      %c0_32 = arith.constant 0 : index
      %c0_33 = arith.constant 0 : index
      %164 = vector.load %arg5[%c0_32, %c0_33] : memref<8x128xf32, #tpu.memory_space<vmem>>, vector<8x128xf32>
      tpu.vector_store %arg5[%c0_32, %c0_33], %163 {strides = array<i32>} : memref<8x128xf32, #tpu.memory_space<vmem>>, vector<8x128xf32>,
    } else {
    }
    return
  }
  func.func @transform_0(%arg0: i32) -> (i32, i32, i32) {
    %c0_i32 = arith.constant 0 : i32
    %c0_i32_0 = arith.constant 0 : i32
    %c0_i32_1 = arith.constant 0 : i32
    return %arg0, %c0_i32, %c0_i32_0 : i32, i32, i32
  }
  func.func @transform_1(%arg0: i32) -> (i32, i32, i32) {
    %c0_i32 = arith.constant 0 : i32
    %c0_i32_0 = arith.constant 0 : i32
    %c0_i32_1 = arith.constant 0 : i32
    return %arg0, %c0_i32, %c0_i32_0 : i32, i32, i32
  }
  func.func @transform_2(%arg0: i32) -> (i32, i32, i32) {
    %c0_i32 = arith.constant 0 : i32
    %c0_i32_0 = arith.constant 0 : i32
    %c0_i32_1 = arith.constant 0 : i32
    return %arg0, %c0_i32, %c0_i32_0 : i32, i32, i32
  }
  func.func @transform_3(%arg0: i32) -> (i32, i32, i32) {
    %c0_i32 = arith.constant 0 : i32
    %c0_i32_0 = arith.constant 0 : i32
    %c0_i32_1 = arith.constant 0 : i32
    return %c0_i32, %arg0, %c0_i32_0 : i32, i32, i32
  }
  func.func @transform_4(%arg0: i32) -> (i32, i32) {
    %c0_i32 = arith.constant 0 : i32
    %c0_i32_0 = arith.constant 0 : i32
    %c0_i32_1 = arith.constant 0 : i32
    return %c0_i32, %c0_i32_0 : i32, i32
  }
}

module attributes {stable_mosaic.version = 11 : i64} {
  func.func @hyper_step_kernel(%arg0: i32, %arg1: i32, %arg2: memref<128x128xbf16, #tpu.memory_space<vmem>>, %arg3: memref<128x128xbf16, #tpu.memory_space<vmem>>, %arg4: memref<128x128xf32, #tpu.memory_space<vmem>>, %arg5: memref<128x128xbf16, #tpu.memory_space<vmem>>, %arg6: memref<128x128xf32, #tpu.memory_space<vmem>>, %arg7: memref<128x128xf32, #tpu.memory_space<vmem>>) attributes {dimension_semantics = [#tpu.dimension_semantics<parallel>, #tpu.dimension_semantics<arbitrary>], iteration_bounds = array<i64: 1, 1>, scalar_prefetch = 0 : i64, scratch_operands = 1 : i64, tpu.core_type = #tpu.core_type<tc>, window_params = [{transform_indices = @transform_0, window_bounds = array<i64: 128, 128>}, {transform_indices = @transform_1, window_bounds = array<i64: 128, 128>}, {transform_indices = @transform_2, window_bounds = array<i64: 128, 128>}, {transform_indices = @transform_3, window_bounds = array<i64: 128, 128>}, {transform_indices = @transform_4, window_bounds = array<i64: 128, 128>}]} {
    %c0_i32 = arith.constant 0 : i32
    %0 = arith.cmpi eq, %arg1, %c0_i32 : i32
    %1 = arith.extui %0 : i1 to i32
    %c0_i32_0 = arith.constant 0 : i32
    %2 = arith.cmpi ne, %1, %c0_i32_0 : i32
    scf.if %2 {
      %cst_10 = arith.constant 0.000000e+00 : f32
      %12 = vector.broadcast %cst_10 : f32 to vector<128x128xf32>
      %c0_11 = arith.constant 0 : index
      %c0_12 = arith.constant 0 : index
      %13 = vector.load %arg7[%c0_11, %c0_12] : memref<128x128xf32, #tpu.memory_space<vmem>>, vector<128x128xf32>
      tpu.vector_store %arg7[%c0_11, %c0_12], %12 {strides = array<i32>} : memref<128x128xf32, #tpu.memory_space<vmem>>, vector<128x128xf32>,
    } else {
    }
    %c0 = arith.constant 0 : index
    %c0_1 = arith.constant 0 : index
    %3 = vector.load %arg7[%c0, %c0_1] : memref<128x128xf32, #tpu.memory_space<vmem>>, vector<128x128xf32>
    %c0_2 = arith.constant 0 : index
    %c0_3 = arith.constant 0 : index
    %4 = vector.load %arg2[%c0_2, %c0_3] : memref<128x128xbf16, #tpu.memory_space<vmem>>, vector<128x128xbf16>
    %c0_4 = arith.constant 0 : index
    %c0_5 = arith.constant 0 : index
    %5 = vector.load %arg3[%c0_4, %c0_5] : memref<128x128xbf16, #tpu.memory_space<vmem>>, vector<128x128xbf16>
    %cst = arith.constant dense<0.000000e+00> : vector<128x128xf32>
    %6 = tpu.matmul %4, %5, %cst {dimension_numbers = #tpu.dot_dimension_numbers<[1], [0], [0], [1], [0, 0, 1, 1], [], []>} : vector<128x128xbf16>, vector<128x128xbf16>, vector<128x128xf32> -> vector<128x128xf32>
    %7 = arith.addf %3, %6 : vector<128x128xf32>
    %c0_6 = arith.constant 0 : index
    %c0_7 = arith.constant 0 : index
    %8 = vector.load %arg7[%c0_6, %c0_7] : memref<128x128xf32, #tpu.memory_space<vmem>>, vector<128x128xf32>
    tpu.vector_store %arg7[%c0_6, %c0_7], %7 {strides = array<i32>} : memref<128x128xf32, #tpu.memory_space<vmem>>, vector<128x128xf32>,
    %c0_i32_8 = arith.constant 0 : i32
    %9 = arith.cmpi eq, %arg1, %c0_i32_8 : i32
    %10 = arith.extui %9 : i1 to i32
    %c0_i32_9 = arith.constant 0 : i32
    %11 = arith.cmpi ne, %10, %c0_i32_9 : i32
    scf.if %11 {
      %c0_10 = arith.constant 0 : index
      %c0_11 = arith.constant 0 : index
      %12 = vector.load %arg7[%c0_10, %c0_11] : memref<128x128xf32, #tpu.memory_space<vmem>>, vector<128x128xf32>
      %13 = arith.truncf %12 : vector<128x128xf32> to vector<128x128xbf16>
      %c0_12 = arith.constant 0 : index
      %c0_13 = arith.constant 0 : index
      %14 = vector.load %arg5[%c0_12, %c0_13] : memref<128x128xbf16, #tpu.memory_space<vmem>>, vector<128x128xbf16>
      tpu.vector_store %arg5[%c0_12, %c0_13], %13 {strides = array<i32>} : memref<128x128xbf16, #tpu.memory_space<vmem>>, vector<128x128xbf16>,
      %c0_14 = arith.constant 0 : index
      %c0_15 = arith.constant 0 : index
      %15 = vector.load %arg4[%c0_14, %c0_15] : memref<128x128xf32, #tpu.memory_space<vmem>>, vector<128x128xf32>
      %c0_16 = arith.constant 0 : index
      %c0_17 = arith.constant 0 : index
      %16 = vector.load %arg7[%c0_16, %c0_17] : memref<128x128xf32, #tpu.memory_space<vmem>>, vector<128x128xf32>
      %17 = arith.addf %15, %16 : vector<128x128xf32>
      %c0_18 = arith.constant 0 : index
      %c0_19 = arith.constant 0 : index
      %18 = vector.load %arg6[%c0_18, %c0_19] : memref<128x128xf32, #tpu.memory_space<vmem>>, vector<128x128xf32>
      tpu.vector_store %arg6[%c0_18, %c0_19], %17 {strides = array<i32>} : memref<128x128xf32, #tpu.memory_space<vmem>>, vector<128x128xf32>,
    } else {
    }
    return
  }
  func.func @transform_0(%arg0: i32, %arg1: i32) -> (i32, i32) {
    %c0_i32 = arith.constant 0 : i32
    return %arg0, %arg1 : i32, i32
  }
  func.func @transform_1(%arg0: i32, %arg1: i32) -> (i32, i32) {
    %c0_i32 = arith.constant 0 : i32
    %c0_i32_0 = arith.constant 0 : i32
    return %arg1, %c0_i32 : i32, i32
  }
  func.func @transform_2(%arg0: i32, %arg1: i32) -> (i32, i32) {
    %c0_i32 = arith.constant 0 : i32
    %c0_i32_0 = arith.constant 0 : i32
    return %arg0, %c0_i32 : i32, i32
  }
  func.func @transform_3(%arg0: i32, %arg1: i32) -> (i32, i32) {
    %c0_i32 = arith.constant 0 : i32
    %c0_i32_0 = arith.constant 0 : i32
    return %arg0, %c0_i32 : i32, i32
  }
  func.func @transform_4(%arg0: i32, %arg1: i32) -> (i32, i32) {
    %c0_i32 = arith.constant 0 : i32
    %c0_i32_0 = arith.constant 0 : i32
    return %arg0, %c0_i32 : i32, i32
  }
}

</mosaic_0001>

<llo_original>
// kernel: dhcn_forward.2
$region0: #{dhcn_forward.2}
  #allocation0 [shape = 'u32[]', space=smem, size = 0x4, offset = 0x4, fixed_abs, tag = 'smem constant byte address 0x4 - core index']
  #allocation1 [shape = 'u32[72,128]{1,0:T(1,128)}', space=vmem, size = 0x9000, scoped, tag = 'internal scratch']
  #allocation2 [shape = 's32[8,8]{1,0:T(8,128)}', space=vmem, size = 0x1000, scoped, tag = 'scratch operand']
  #allocation3 [shape = 'f32[8,128]{1,0:T(8,128)}', space=vmem, size = 0x1000, scoped, tag = 'scratch operand']
  %s0 = inlined_call_operand.vmem [shape: s32[1,8,16], index: 0, kind: input, shape index: {}]
  %s1 = inlined_call_operand.vmem [shape: s32[1,16,8], index: 1, kind: input, shape index: {}]
  %s2 = inlined_call_operand.vmem [shape: f32[1,8,16], index: 2, kind: input, shape index: {}]
  %s3 = inlined_call_operand.vmem [shape: f32[8,16,128], index: 3, kind: input, shape index: {}]
  %s4 = inlined_call_operand.hbm [shape: f32[8,128], index: 4, kind: output, shape index: {}]
  %s5 = sld [smem:[#allocation0]]
  $region34: #{dhcn_forward.2} parent=0
    _
  %s7 = ssub.s32 1, %s5
  %s8 = scalar_select 0, %s7, %s5
  $region1: #{dhcn_forward.2} parent=0
    #allocation4 [shape = 'u8[4096]{0}', space=vmem, size = 0x1000, scoped, tag = 'output window, operand 0, single buffered']
    #allocation5 [shape = 's32[1]{0}', space=sflag, size = 0x4, scoped, tag = 'scoped memory for dhcn_forward.2']
    %9 = vsyncpa [#allocation5], 0
    // Predicated region
    $region2: #{dhcn_forward.2} parent=1 // pred_check
      _
    $region3: #{dhcn_forward.2} parent=1 // pred_check_branch
      %11 = sbr.rel (0) target = $region5
    $region4: #{dhcn_forward.2} parent=1 // pred_region
      _
    $region5: #{dhcn_forward.2} parent=1 // pred_fallthru
      _
    // Predicated region
    $region6: #{dhcn_forward.2} parent=1 // pred_check
      _
    $region7: #{dhcn_forward.2} parent=1 // pred_check_branch
      %13 = sbr.rel (0) target = $region9
    $region8: #{dhcn_forward.2} parent=1 // pred_region
      _
    $region9: #{dhcn_forward.2} parent=1 // pred_fallthru
      _
    // Predicated region
    $region10: #{dhcn_forward.2} parent=1 // pred_check
      _
    $region11: #{dhcn_forward.2} parent=1 // pred_check_branch
      %15 = sbr.rel (0) target = $region13
    $region12: #{dhcn_forward.2} parent=1 // pred_region
      _
    $region13: #{dhcn_forward.2} parent=1 // pred_fallthru
      _
    // Predicated region
    $region14: #{dhcn_forward.2} parent=1 // pred_check
      _
    $region15: #{dhcn_forward.2} parent=1 // pred_check_branch
      %17 = sbr.rel (0) target = $region17
    $region16: #{dhcn_forward.2} parent=1 // pred_region
      _
    $region17: #{dhcn_forward.2} parent=1 // pred_fallthru
      _
    %p18 = scmp.eq.s32.totalorder 0, 0
    // Predicated region
    $region18: #{dhcn_forward.2} parent=1 // pred_check
      %p19 = pneg %p18
    $region19: #{dhcn_forward.2} parent=1 // pred_check_branch
      %21 = sbr.rel (%p19) target = $region21
    $region20: #{dhcn_forward.2} parent=1 // pred_region
      %vm22 = vcmask 64512
      %23 = vst.msk [vmem:[#allocation2] sm:$0xff] %vm22, 0
      %24 = vst [vmem:[#allocation3] sm:$0xff] 0.0
    $region21: #{dhcn_forward.2} parent=1 // pred_fallthru
      _
    %v25 = vld [vmem:[%s0] sm:$0xff]
    %v26 = vld [vmem:[%s1] sm:$0xff]
    %v27 = vld [vmem:[%s1 + $0x8] sm:$0xff]
    %v28 = vld [vmem:[%s2] sm:$0xff]
    %v29 = vld [vmem:[%s3] sm:$0xff]
    %v30 = vld [vmem:[%s3 + $0x8] sm:$0xff]
    %v31 = vld [vmem:[%s3 + $0x10] sm:$0xff]
    %v32 = vld [vmem:[%s3 + $0x18] sm:$0xff]
    %v33 = vld [vmem:[%s3 + $0x20] sm:$0xff]
    %v34 = vld [vmem:[%s3 + $0x28] sm:$0xff]
    %v35 = vld [vmem:[%s3 + $0x30] sm:$0xff]
    %v36 = vld [vmem:[%s3 + $0x38] sm:$0xff]
    %v37 = vld [vmem:[%s3 + $0x40] sm:$0xff]
    %v38 = vld [vmem:[%s3 + $0x48] sm:$0xff]
    %v39 = vld [vmem:[%s3 + $0x50] sm:$0xff]
    %v40 = vld [vmem:[%s3 + $0x58] sm:$0xff]
    %v41 = vld [vmem:[%s3 + $0x60] sm:$0xff]
    %v42 = vld [vmem:[%s3 + $0x68] sm:$0xff]
    %v43 = vld [vmem:[%s3 + $0x70] sm:$0xff]
    %v44 = vld [vmem:[%s3 + $0x78] sm:$0xff]
    %45 = vset.pattern.permute.xlu0 0
    %46 = vperm.xlu0 %45, %v25
    %v47 = vpop.permute.xlu0 %46
    %v48 = vperm.slane %v26, 0
    %vm49 = vcmp.eq.s32.totalorder %v47, %v48
    %v50 = vsel %vm49, 1, 0
    %51 = vset.pattern.permute.xlu0 1
    %52 = vperm.xlu0 %51, %v25
    %v53 = vpop.permute.xlu0 %52
    %v54 = vperm.slane %v26, 1
    %vm55 = vcmp.eq.s32.totalorder %v53, %v54
    %v56 = vsel %vm55, 1, 0
    %v57 = vadd.s32 %v50, %v56
    %58 = vset.pattern.permute.xlu0 2
    %59 = vperm.xlu0 %58, %v25
    %v60 = vpop.permute.xlu0 %59
    %v61 = vperm.slane %v26, 2
    %vm62 = vcmp.eq.s32.totalorder %v60, %v61
    %v63 = vsel %vm62, 1, 0
    %v64 = vadd.s32 %v57, %v63
    %65 = vset.pattern.permute.xlu0 3
    %66 = vperm.xlu0 %65, %v25
    %v67 = vpop.permute.xlu0 %66
    %v68 = vperm.slane %v26, 3
    %vm69 = vcmp.eq.s32.totalorder %v67, %v68
    %v70 = vsel %vm69, 1, 0
    %v71 = vadd.s32 %v64, %v70
    %72 = vset.pattern.permute.xlu0 4
    %73 = vperm.xlu0 %72, %v25
    %v74 = vpop.permute.xlu0 %73
    %v75 = vperm.slane %v26, 4
    %vm76 = vcmp.eq.s32.totalorder %v74, %v75
    %v77 = vsel %vm76, 1, 0
    %v78 = vadd.s32 %v71, %v77
    %79 = vset.pattern.permute.xlu0 5
    %80 = vperm.xlu0 %79, %v25
    %v81 = vpop.permute.xlu0 %80
    %v82 = vperm.slane %v26, 5
    %vm83 = vcmp.eq.s32.totalorder %v81, %v82
    %v84 = vsel %vm83, 1, 0
    %v85 = vadd.s32 %v78, %v84
    %86 = vset.pattern.permute.xlu0 6
    %87 = vperm.xlu0 %86, %v25
    %v88 = vpop.permute.xlu0 %87
    %v89 = vperm.slane %v26, 6
    %vm90 = vcmp.eq.s32.totalorder %v88, %v89
    %v91 = vsel %vm90, 1, 0
    %v92 = vadd.s32 %v85, %v91
    %93 = vset.pattern.permute.xlu0 7
    %94 = vperm.xlu0 %93, %v25
    %v95 = vpop.permute.xlu0 %94
    %v96 = vperm.slane %v26, 7
    %vm97 = vcmp.eq.s32.totalorder %v95, %v96
    %v98 = vsel %vm97, 1, 0
    %v99 = vadd.s32 %v92, %v98
    %100 = vset.pattern.permute.xlu0 8
    %101 = vperm.xlu0 %100, %v25
    %v102 = vpop.permute.xlu0 %101
    %v103 = vperm.slane %v27, 0
    %vm104 = vcmp.eq.s32.totalorder %v102, %v103
    %v105 = vsel %vm104, 1, 0
    %v106 = vadd.s32 %v99, %v105
    %107 = vset.pattern.permute.xlu0 9
    %108 = vperm.xlu0 %107, %v25
    %v109 = vpop.permute.xlu0 %108
    %v110 = vperm.slane %v27, 1
    %vm111 = vcmp.eq.s32.totalorder %v109, %v110
    %v112 = vsel %vm111, 1, 0
    %v113 = vadd.s32 %v106, %v112
    %114 = vset.pattern.permute.xlu0 10
    %115 = vperm.xlu0 %114, %v25
    %v116 = vpop.permute.xlu0 %115
    %v117 = vperm.slane %v27, 2
    %vm118 = vcmp.eq.s32.totalorder %v116, %v117
    %v119 = vsel %vm118, 1, 0
    %v120 = vadd.s32 %v113, %v119
    %121 = vset.pattern.permute.xlu0 11
    %122 = vperm.xlu0 %121, %v25
    %v123 = vpop.permute.xlu0 %122
    %v124 = vperm.slane %v27, 3
    %vm125 = vcmp.eq.s32.totalorder %v123, %v124
    %v126 = vsel %vm125, 1, 0
    %v127 = vadd.s32 %v120, %v126
    %128 = vset.pattern.permute.xlu0 12
    %129 = vperm.xlu0 %128, %v25
    %v130 = vpop.permute.xlu0 %129
    %v131 = vperm.slane %v27, 4
    %vm132 = vcmp.eq.s32.totalorder %v130, %v131
    %v133 = vsel %vm132, 1, 0
    %v134 = vadd.s32 %v127, %v133
    %135 = vset.pattern.permute.xlu0 13
    %136 = vperm.xlu0 %135, %v25
    %v137 = vpop.permute.xlu0 %136
    %v138 = vperm.slane %v27, 5
    %vm139 = vcmp.eq.s32.totalorder %v137, %v138
    %v140 = vsel %vm139, 1, 0
    %v141 = vadd.s32 %v134, %v140
    %142 = vset.pattern.permute.xlu0 14
    %143 = vperm.xlu0 %142, %v25
    %v144 = vpop.permute.xlu0 %143
    %v145 = vperm.slane %v27, 6
    %vm146 = vcmp.eq.s32.totalorder %v144, %v145
    %v147 = vsel %vm146, 1, 0
    %v148 = vadd.s32 %v141, %v147
    %149 = vset.pattern.permute.xlu0 15
    %150 = vperm.xlu0 %149, %v25
    %v151 = vpop.permute.xlu0 %150
    %v152 = vperm.slane %v27, 7
    %vm153 = vcmp.eq.s32.totalorder %v151, %v152
    %v154 = vsel %vm153, 1, 0
    %v155 = vadd.s32 %v148, %v154
    %v156 = vld [vmem:[#allocation2] sm:$0xff]
    %v157 = vadd.s32 %v156, %v155
    %vm158 = vcmask 64512
    %159 = vst.msk [vmem:[#allocation2] sm:$0xff] %vm158, %v157
    %v160 = vld [vmem:[#allocation3] sm:$0xff]
    %v161 = vperm.slane %v28, 0
    %v162 = vlaneseq
    %v163 = vshrl.u32 %v162, 7
    %165 = vset.pattern.permute.xlu0 %v163
    %166 = vperm.xlu0 %165, %v161
    %v167 = vpop.permute.xlu0 %166
    %v168 = vlaneseq
    %v169 = vshrl.u32 %v168, 7
    %v170 = vadd.s32 %v169, 8
    %171 = vset.pattern.permute.xlu0 %v170
    %172 = vperm.xlu0 %171, %v161
    %v173 = vpop.permute.xlu0 %172
    %v174 = vperm.slane %v28, 1
    %v175 = vlaneseq
    %v176 = vshrl.u32 %v175, 7
    %178 = vset.pattern.permute.xlu0 %v176
    %179 = vperm.xlu0 %178, %v174
    %v180 = vpop.permute.xlu0 %179
    %v181 = vlaneseq
    %v182 = vshrl.u32 %v181, 7
    %v183 = vadd.s32 %v182, 8
    %184 = vset.pattern.permute.xlu0 %v183
    %185 = vperm.xlu0 %184, %v174
    %v186 = vpop.permute.xlu0 %185
    %v187 = vperm.slane %v28, 2
    %v188 = vlaneseq
    %v189 = vshrl.u32 %v188, 7
    %191 = vset.pattern.permute.xlu0 %v189
    %192 = vperm.xlu0 %191, %v187
    %v193 = vpop.permute.xlu0 %192
    %v194 = vlaneseq
    %v195 = vshrl.u32 %v194, 7
    %v196 = vadd.s32 %v195, 8
    %197 = vset.pattern.permute.xlu0 %v196
    %198 = vperm.xlu0 %197, %v187
    %v199 = vpop.permute.xlu0 %198
    %v200 = vperm.slane %v28, 3
    %v201 = vlaneseq
    %v202 = vshrl.u32 %v201, 7
    %204 = vset.pattern.permute.xlu0 %v202
    %205 = vperm.xlu0 %204, %v200
    %v206 = vpop.permute.xlu0 %205
    %v207 = vlaneseq
    %v208 = vshrl.u32 %v207, 7
    %v209 = vadd.s32 %v208, 8
    %210 = vset.pattern.permute.xlu0 %v209
    %211 = vperm.xlu0 %210, %v200
    %v212 = vpop.permute.xlu0 %211
    %v213 = vperm.slane %v28, 4
    %v214 = vlaneseq
    %v215 = vshrl.u32 %v214, 7
    %217 = vset.pattern.permute.xlu0 %v215
    %218 = vperm.xlu0 %217, %v213
    %v219 = vpop.permute.xlu0 %218
    %v220 = vlaneseq
    %v221 = vshrl.u32 %v220, 7
    %v222 = vadd.s32 %v221, 8
    %223 = vset.pattern.permute.xlu0 %v222
    %224 = vperm.xlu0 %223, %v213
    %v225 = vpop.permute.xlu0 %224
    %v226 = vperm.slane %v28, 5
    %v227 = vlaneseq
    %v228 = vshrl.u32 %v227, 7
    %230 = vset.pattern.permute.xlu0 %v228
    %231 = vperm.xlu0 %230, %v226
    %v232 = vpop.permute.xlu0 %231
    %v233 = vlaneseq
    %v234 = vshrl.u32 %v233, 7
    %v235 = vadd.s32 %v234, 8
    %236 = vset.pattern.permute.xlu0 %v235
    %237 = vperm.xlu0 %236, %v226
    %v238 = vpop.permute.xlu0 %237
    %v239 = vperm.slane %v28, 6
    %v240 = vlaneseq
    %v241 = vshrl.u32 %v240, 7
    %243 = vset.pattern.permute.xlu0 %v241
    %244 = vperm.xlu0 %243, %v239
    %v245 = vpop.permute.xlu0 %244
    %v246 = vlaneseq
    %v247 = vshrl.u32 %v246, 7
    %v248 = vadd.s32 %v247, 8
    %249 = vset.pattern.permute.xlu0 %v248
    %250 = vperm.xlu0 %249, %v239
    %v251 = vpop.permute.xlu0 %250
    %v252 = vperm.slane %v28, 7
    %v253 = vlaneseq
    %v254 = vshrl.u32 %v253, 7
    %256 = vset.pattern.permute.xlu0 %v254
    %257 = vperm.xlu0 %256, %v252
    %v258 = vpop.permute.xlu0 %257
    %v259 = vlaneseq
    %v260 = vshrl.u32 %v259, 7
    %v261 = vadd.s32 %v260, 8
    %262 = vset.pattern.permute.xlu0 %v261
    %263 = vperm.xlu0 %262, %v252
    %v264 = vpop.permute.xlu0 %263
    %v265 = vmul.f32 %v29, %v167
    %v266 = vmul.f32 %v30, %v173
    %v267 = vmul.f32 %v31, %v180
    %v268 = vmul.f32 %v32, %v186
    %v269 = vmul.f32 %v33, %v193
    %v270 = vmul.f32 %v34, %v199
    %v271 = vmul.f32 %v35, %v206
    %v272 = vmul.f32 %v36, %v212
    %v273 = vmul.f32 %v37, %v219
    %v274 = vmul.f32 %v38, %v225
    %v275 = vmul.f32 %v39, %v232
    %v276 = vmul.f32 %v40, %v238
    %v277 = vmul.f32 %v41, %v245
    %v278 = vmul.f32 %v42, %v251
    %v279 = vmul.f32 %v43, %v258
    %v280 = vmul.f32 %v44, %v264
    %v281 = vadd.f32 %v265, %v266
    %v282 = vrot.slane %v281, 4
    %v283 = vadd.f32 %v281, %v282
    %v284 = vrot.slane %v283, 2
    %v285 = vadd.f32 %v283, %v284
    %v286 = vrot.slane %v285, 1
    %v287 = vadd.f32 %v285, %v286
    %v288 = vadd.f32 %v267, %v268
    %v289 = vrot.slane %v288, 4
    %v290 = vadd.f32 %v288, %v289
    %v291 = vrot.slane %v290, 2
    %v292 = vadd.f32 %v290, %v291
    %v293 = vrot.slane %v292, 1
    %v294 = vadd.f32 %v292, %v293
    %v295 = vadd.f32 %v269, %v270
    %v296 = vrot.slane %v295, 4
    %v297 = vadd.f32 %v295, %v296
    %v298 = vrot.slane %v297, 2
    %v299 = vadd.f32 %v297, %v298
    %v300 = vrot.slane %v299, 1
    %v301 = vadd.f32 %v299, %v300
    %v302 = vadd.f32 %v271, %v272
    %v303 = vrot.slane %v302, 4
    %v304 = vadd.f32 %v302, %v303
    %v305 = vrot.slane %v304, 2
    %v306 = vadd.f32 %v304, %v305
    %v307 = vrot.slane %v306, 1
    %v308 = vadd.f32 %v306, %v307
    %v309 = vadd.f32 %v273, %v274
    %v310 = vrot.slane %v309, 4
    %v311 = vadd.f32 %v309, %v310
    %v312 = vrot.slane %v311, 2
    %v313 = vadd.f32 %v311, %v312
    %v314 = vrot.slane %v313, 1
    %v315 = vadd.f32 %v313, %v314
    %v316 = vadd.f32 %v275, %v276
    %v317 = vrot.slane %v316, 4
    %v318 = vadd.f32 %v316, %v317
    %v319 = vrot.slane %v318, 2
    %v320 = vadd.f32 %v318, %v319
    %v321 = vrot.slane %v320, 1
    %v322 = vadd.f32 %v320, %v321
    %v323 = vadd.f32 %v277, %v278
    %v324 = vrot.slane %v323, 4
    %v325 = vadd.f32 %v323, %v324
    %v326 = vrot.slane %v325, 2
    %v327 = vadd.f32 %v325, %v326
    %v328 = vrot.slane %v327, 1
    %v329 = vadd.f32 %v327, %v328
    %v330 = vadd.f32 %v279, %v280
    %v331 = vrot.slane %v330, 4
    %v332 = vadd.f32 %v330, %v331
    %v333 = vrot.slane %v332, 2
    %v334 = vadd.f32 %v332, %v333
    %v335 = vrot.slane %v334, 1
    %v336 = vadd.f32 %v334, %v335
    %vm345 = vcmask 1041409
    %v346 = vsel %vm345, %v294, %v287
    %vm347 = vcmask 1042434
    %v348 = vsel %vm347, %v301, %v346
    %vm349 = vcmask 1043459
    %v350 = vsel %vm349, %v308, %v348
    %vm351 = vcmask 1044484
    %v352 = vsel %vm351, %v315, %v350
    %vm353 = vcmask 1045509
    %v354 = vsel %vm353, %v322, %v352
    %vm355 = vcmask 1046534
    %v356 = vsel %vm355, %v329, %v354
    %vm357 = vcmask 1047559
    %v358 = vsel %vm357, %v336, %v356
    %v360 = vadd.f32 %v160, %v358
    %361 = vst [vmem:[#allocation3] sm:$0xff] %v360
    // Predicated region
    $region22: #{dhcn_forward.2} parent=1 // pred_check
      %p362 = pneg %p18
    $region23: #{dhcn_forward.2} parent=1 // pred_check_branch
      %364 = sbr.rel (%p362) target = $region25
    $region24: #{dhcn_forward.2} parent=1 // pred_region
      %v365 = vld [vmem:[#allocation2] sm:$0xff]
      %v366 = vcvt.s32.f32 %v365
      %v367 = vlaneseq
      %v368 = vshrl.u32 %v367, 7
      %v369 = vlaneseq
      %v370 = vand.u32 %v369, 127
      %vm371 = vcmp.eq.s32.totalorder %v368, %v370
      %v372 = vsel %vm371, 1, 0
      %v373 = vcvt.s32.f32 %v372
      %v374 = vmul.f32 %v366, %v373
      %v375 = vsel %vm158, %v374, 0.0
      %v376 = vrot.slane %v375, 4
      %v377 = vadd.f32 %v375, %v376
      %v378 = vrot.slane %v377, 2
      %v379 = vadd.f32 %v377, %v378
      %v380 = vrot.slane %v379, 1
      %v381 = vadd.f32 %v379, %v380
      %382 = vadd.xlane.f32.xlu0 %v375
      %v383 = vpop.xlane.xlu0 %382
      %v384 = vmul.f32 %v381, 2.0
      %v385 = vsub.f32 %v384, %v366
      %v386 = vrcp.pop %v385
      %v387 = vmul.f32 %v385, %v386
      %v388 = vsub.f32 1.0, %v387
      %v389 = vmul.f32 %v386, %v388
      %v390 = vadd.f32 %v386, %v389
      %vm391 = vweird.f32 %v385
      %vm392 = vweird.f32 %v386
      %vm393 = vmor %vm391, %vm392
      %v394 = vsel %vm393, %v386, %v390
      %v395 = vand.u32 2147483647, %v385
      %vm396 = vcmp.eq.f32.partialorder %v395, 8.507059e+37
      %v397 = vand.u32 %v385, 2147483648
      %v398 = vor.u32 1.1754944e-38, %v397
      %v399 = vsel %vm396, %v398, %v394
      %v400 = vmul.f32 %v366, %v399
      %v401 = vadd.f32 %v400, %v373
      %v402 = vsel %vm158, %v401, 0.0
      %403 = vadd.xlane.f32.xlu0 %v402
      %v404 = vpop.xlane.xlu0 %403
      %v405 = vrcp.pop %v404
      %v406 = vmul.f32 %v404, %v405
      %v407 = vsub.f32 1.0, %v406
      %v408 = vmul.f32 %v405, %v407
      %v409 = vadd.f32 %v405, %v408
      %vm410 = vweird.f32 %v404
      %vm411 = vweird.f32 %v405
      %vm412 = vmor %vm410, %vm411
      %v413 = vsel %vm412, %v405, %v409
      %v414 = vand.u32 2147483647, %v404
      %vm415 = vcmp.eq.f32.partialorder %v414, 8.507059e+37
      %v416 = vand.u32 %v404, 2147483648
      %v417 = vor.u32 1.1754944e-38, %v416
      %v418 = vsel %vm415, %v417, %v413
      %v419 = vmul.f32 %v401, %v418
      %v420 = vld [vmem:[#allocation3] sm:$0xff]
      %v421 = vrcp.pop %v383
      %v422 = vmul.f32 %v383, %v421
      %v423 = vsub.f32 1.0, %v422
      %v424 = vmul.f32 %v421, %v423
      %v425 = vadd.f32 %v421, %v424
      %vm426 = vweird.f32 %v383
      %vm427 = vweird.f32 %v421
      %vm428 = vmor %vm426, %vm427
      %v429 = vsel %vm428, %v421, %v425
      %v430 = vand.u32 2147483647, %v383
      %vm431 = vcmp.eq.f32.partialorder %v430, 8.507059e+37
      %v432 = vand.u32 %v383, 2147483648
      %v433 = vor.u32 1.1754944e-38, %v432
      %v434 = vsel %vm431, %v433, %v429
      %v435 = vmul.f32 %v420, %v434
      %v437 = vsel %vm158, %v419, 0
      %439 = vmatpush.msra.mxu0 0.0
      %440 = vmatpush.msra.mxu0 0.0
      %441 = vmatpush.msra.mxu0 0.0
      %442 = vmatpush.msra.mxu0 0.0
      %443 = vmatpush.msra.mxu0 0.0
      %444 = vmatpush.msra.mxu0 0.0
      %445 = vmatpush.msra.mxu0 0.0
      %446 = vmatpush.msra.mxu0 0.0
      %447 = vmatpush.msra.mxu0 0.0
      %448 = vmatpush.msra.mxu0 0.0
      %449 = vmatpush.msra.mxu0 0.0
      %450 = vmatpush.msra.mxu0 0.0
      %451 = vmatpush.msra.mxu0 0.0
      %452 = vmatpush.msra.mxu0 0.0
      %453 = vmatpush.msra.mxu0 0.0
      %454 = vmatpush.msra.mxu0 %v435
      %455 = vmatmul.f32.gmra.mxu0 %v437
      %v456 = vpop.f32.mrf.mxu0
      %v457 = vadd.f32 0.0, %v456
      %458 = vdwg.mxu0
      %v459 = vadd.f32 %v435, %v457
      %v460 = vmul.f32 %v459, 0.5
      %461 = vst [vmem:[#allocation4] sm:$0xff] %v460
    $region25: #{dhcn_forward.2} parent=1 // pred_fallthru
      _
    // Predicated region
    $region26: #{dhcn_forward.2} parent=1 // pred_check
      _
    $region27: #{dhcn_forward.2} parent=1 // pred_check_branch
      %463 = sbr.rel (0) target = $region29
    $region28: #{dhcn_forward.2} parent=1 // pred_region
      %465 = vsyncadd [#allocation5], 0
      %s467 = sshll.u32 [#allocation4], 4
      %s468 = int_to_ptr.vmem [resolvable:$true] %s467
      %s469 = sshll.u32 %s4, 4
      %s470 = int_to_ptr.hbm [resolvable:$true] %s469
      %472 = dma.vmem_to_hbm [thread:$0]  %s468, 128, %s470, [#allocation5]
    $region29: #{dhcn_forward.2} parent=1 // pred_fallthru
      _
    // Predicated region
    $region30: #{dhcn_forward.2} parent=1 // pred_check
      _
    $region31: #{dhcn_forward.2} parent=1 // pred_check_branch
      %474 = sbr.rel (0) target = $region33
    $region32: #{dhcn_forward.2} parent=1 // pred_region
      %476 = dma.done [#allocation5], 128
    $region33: #{dhcn_forward.2} parent=1 // pred_fallthru
      _
    %477 = vsyncpa [#allocation5], 1

// kernel: dhcn_forward.3
$region0: #{dhcn_forward.3}
  #allocation0 [shape = 'u32[]', space=smem, size = 0x4, offset = 0x4, fixed_abs, tag = 'smem constant byte address 0x4 - core index']
  #allocation1 [shape = 'u32[72,128]{1,0:T(1,128)}', space=vmem, size = 0x9000, scoped, tag = 'internal scratch']
  #allocation2 [shape = 'f32[128,128]{1,0:T(8,128)}', space=vmem, size = 0x10000, scoped, tag = 'scratch operand']
  %s0 = inlined_call_operand.vmem [shape: bf16[128,128], index: 0, kind: input, shape index: {}]
  %s1 = inlined_call_operand.vmem [shape: bf16[128,128], index: 1, kind: input, shape index: {}]
  %s2 = inlined_call_operand.vmem [shape: f32[128,128], index: 2, kind: input, shape index: {}]
  %s3 = inlined_call_operand.hbm [shape: bf16[128,128], index: 3, kind: output, shape index: {0}]
  %s4 = inlined_call_operand.vmem [shape: f32[128,128], index: 4, kind: output, shape index: {1}]
  %5 = xla_tuple %s3, %s4
  %s6 = sld [smem:[#allocation0]]
  $region38: #{dhcn_forward.3} parent=0
    _
  %s8 = ssub.s32 1, %s6
  %s9 = scalar_select 0, %s8, %s6
  $region1: #{dhcn_forward.3} parent=0
    #allocation3 [shape = 'u8[32768]{0}', space=vmem, size = 0x8000, scoped, tag = 'output window, operand 0, single buffered']
    #allocation4 [shape = 's32[1]{0}', space=sflag, size = 0x4, scoped, tag = 'scoped memory for dhcn_forward.3']
    %10 = vsyncpa [#allocation4], 0
    // Predicated region
    $region2: #{dhcn_forward.3} parent=1 // pred_check
      _
    $region3: #{dhcn_forward.3} parent=1 // pred_check_branch
      %12 = sbr.rel (0) target = $region5
    $region4: #{dhcn_forward.3} parent=1 // pred_region
      _
    $region5: #{dhcn_forward.3} parent=1 // pred_fallthru
      _
    // Predicated region
    $region6: #{dhcn_forward.3} parent=1 // pred_check
      _
    $region7: #{dhcn_forward.3} parent=1 // pred_check_branch
      %14 = sbr.rel (0) target = $region9
    $region8: #{dhcn_forward.3} parent=1 // pred_region
      _
    $region9: #{dhcn_forward.3} parent=1 // pred_fallthru
      _
    // Predicated region
    $region10: #{dhcn_forward.3} parent=1 // pred_check
      _
    $region11: #{dhcn_forward.3} parent=1 // pred_check_branch
      %16 = sbr.rel (0) target = $region13
    $region12: #{dhcn_forward.3} parent=1 // pred_region
      _
    $region13: #{dhcn_forward.3} parent=1 // pred_fallthru
      _
    %p17 = scmp.eq.s32.totalorder 0, 0
    // Predicated region
    $region14: #{dhcn_forward.3} parent=1 // pred_check
      %p18 = pneg %p17
    $region15: #{dhcn_forward.3} parent=1 // pred_check_branch
      %20 = sbr.rel (%p18) target = $region17
    $region16: #{dhcn_forward.3} parent=1 // pred_region
      %21 = vst [vmem:[#allocation2] sm:$0xff] 0.0
      %22 = vst [vmem:[#allocation2 + $0x8] sm:$0xff] 0.0
      %23 = vst [vmem:[#allocation2 + $0x10] sm:$0xff] 0.0
      %24 = vst [vmem:[#allocation2 + $0x18] sm:$0xff] 0.0
      %25 = vst [vmem:[#allocation2 + $0x20] sm:$0xff] 0.0
      %26 = vst [vmem:[#allocation2 + $0x28] sm:$0xff] 0.0
      %27 = vst [vmem:[#allocation2 + $0x30] sm:$0xff] 0.0
      %28 = vst [vmem:[#allocation2 + $0x38] sm:$0xff] 0.0
      %29 = vst [vmem:[#allocation2 + $0x40] sm:$0xff] 0.0
      %30 = vst [vmem:[#allocation2 + $0x48] sm:$0xff] 0.0
      %31 = vst [vmem:[#allocation2 + $0x50] sm:$0xff] 0.0
      %32 = vst [vmem:[#allocation2 + $0x58] sm:$0xff] 0.0
      %33 = vst [vmem:[#allocation2 + $0x60] sm:$0xff] 0.0
      %34 = vst [vmem:[#allocation2 + $0x68] sm:$0xff] 0.0
      %35 = vst [vmem:[#allocation2 + $0x70] sm:$0xff] 0.0
      %36 = vst [vmem:[#allocation2 + $0x78] sm:$0xff] 0.0
    $region17: #{dhcn_forward.3} parent=1 // pred_fallthru
      _
    %v37 = vld [vmem:[#allocation2] sm:$0xff]
    %v38 = vld [vmem:[#allocation2 + $0x8] sm:$0xff]
    %v39 = vld [vmem:[#allocation2 + $0x10] sm:$0xff]
    %v40 = vld [vmem:[#allocation2 + $0x18] sm:$0xff]
    %v41 = vld [vmem:[#allocation2 + $0x20] sm:$0xff]
    %v42 = vld [vmem:[#allocation2 + $0x28] sm:$0xff]
    %v43 = vld [vmem:[#allocation2 + $0x30] sm:$0xff]
    %v44 = vld [vmem:[#allocation2 + $0x38] sm:$0xff]
    %v45 = vld [vmem:[#allocation2 + $0x40] sm:$0xff]
    %v46 = vld [vmem:[#allocation2 + $0x48] sm:$0xff]
    %v47 = vld [vmem:[#allocation2 + $0x50] sm:$0xff]
    %v48 = vld [vmem:[#allocation2 + $0x58] sm:$0xff]
    %v49 = vld [vmem:[#allocation2 + $0x60] sm:$0xff]
    %v50 = vld [vmem:[#allocation2 + $0x68] sm:$0xff]
    %v51 = vld [vmem:[#allocation2 + $0x70] sm:$0xff]
    %v52 = vld [vmem:[#allocation2 + $0x78] sm:$0xff]
    %v53 = vld [vmem:[%s0] sm:$0xf]
    %v54 = vld [vmem:[%s0 + $0x4] sm:$0xf]
    %v55 = vld [vmem:[%s0 + $0x8] sm:$0xf]
    %v56 = vld [vmem:[%s0 + $0xc] sm:$0xf]
    %v57 = vld [vmem:[%s0 + $0x10] sm:$0xf]
    %v58 = vld [vmem:[%s0 + $0x14] sm:$0xf]
    %v59 = vld [vmem:[%s0 + $0x18] sm:$0xf]
    %v60 = vld [vmem:[%s0 + $0x1c] sm:$0xf]
    %v61 = vld [vmem:[%s0 + $0x20] sm:$0xf]
    %v62 = vld [vmem:[%s0 + $0x24] sm:$0xf]
    %v63 = vld [vmem:[%s0 + $0x28] sm:$0xf]
    %v64 = vld [vmem:[%s0 + $0x2c] sm:$0xf]
    %v65 = vld [vmem:[%s0 + $0x30] sm:$0xf]
    %v66 = vld [vmem:[%s0 + $0x34] sm:$0xf]
    %v67 = vld [vmem:[%s0 + $0x38] sm:$0xf]
    %v68 = vld [vmem:[%s0 + $0x3c] sm:$0xf]
    %v69 = vld [vmem:[%s1] sm:$0xf]
    %v70 = vld [vmem:[%s1 + $0x4] sm:$0xf]
    %v71 = vld [vmem:[%s1 + $0x8] sm:$0xf]
    %v72 = vld [vmem:[%s1 + $0xc] sm:$0xf]
    %v73 = vld [vmem:[%s1 + $0x10] sm:$0xf]
    %v74 = vld [vmem:[%s1 + $0x14] sm:$0xf]
    %v75 = vld [vmem:[%s1 + $0x18] sm:$0xf]
    %v76 = vld [vmem:[%s1 + $0x1c] sm:$0xf]
    %v77 = vld [vmem:[%s1 + $0x20] sm:$0xf]
    %v78 = vld [vmem:[%s1 + $0x24] sm:$0xf]
    %v79 = vld [vmem:[%s1 + $0x28] sm:$0xf]
    %v80 = vld [vmem:[%s1 + $0x2c] sm:$0xf]
    %v81 = vld [vmem:[%s1 + $0x30] sm:$0xf]
    %v82 = vld [vmem:[%s1 + $0x34] sm:$0xf]
    %v83 = vld [vmem:[%s1 + $0x38] sm:$0xf]
    %v84 = vld [vmem:[%s1 + $0x3c] sm:$0xf]
    %v101 = vunpack.c.l.b16 %v53
    %v102 = vunpack.c.l.b16 %v54
    %v103 = vunpack.c.l.b16 %v55
    %v104 = vunpack.c.l.b16 %v56
    %v105 = vunpack.c.l.b16 %v57
    %v106 = vunpack.c.l.b16 %v58
    %v107 = vunpack.c.l.b16 %v59
    %v108 = vunpack.c.l.b16 %v60
    %v109 = vunpack.c.l.b16 %v61
    %v110 = vunpack.c.l.b16 %v62
    %v111 = vunpack.c.l.b16 %v63
    %v112 = vunpack.c.l.b16 %v64
    %v113 = vunpack.c.l.b16 %v65
    %v114 = vunpack.c.l.b16 %v66
    %v115 = vunpack.c.l.b16 %v67
    %v116 = vunpack.c.l.b16 %v68
    %v117 = vpack.c.b16 %v102, %v101
    %v118 = vpack.c.b16 %v104, %v103
    %v119 = vpack.c.b16 %v106, %v105
    %v120 = vpack.c.b16 %v108, %v107
    %v121 = vpack.c.b16 %v110, %v109
    %v122 = vpack.c.b16 %v112, %v111
    %v123 = vpack.c.b16 %v114, %v113
    %v124 = vpack.c.b16 %v116, %v115
    %v149 = vunpack.c.l.b16 %v69
    %v150 = vunpack.c.l.b16 %v70
    %v151 = vunpack.c.l.b16 %v71
    %v152 = vunpack.c.l.b16 %v72
    %v153 = vunpack.c.l.b16 %v73
    %v154 = vunpack.c.l.b16 %v74
    %v155 = vunpack.c.l.b16 %v75
    %v156 = vunpack.c.l.b16 %v76
    %v157 = vunpack.c.l.b16 %v77
    %v158 = vunpack.c.l.b16 %v78
    %v159 = vunpack.c.l.b16 %v79
    %v160 = vunpack.c.l.b16 %v80
    %v161 = vunpack.c.l.b16 %v81
    %v162 = vunpack.c.l.b16 %v82
    %v163 = vunpack.c.l.b16 %v83
    %v164 = vunpack.c.l.b16 %v84
    %v165 = vpack.c.b16 %v150, %v149
    %v166 = vpack.c.b16 %v152, %v151
    %v167 = vpack.c.b16 %v154, %v153
    %v168 = vpack.c.b16 %v156, %v155
    %v169 = vpack.c.b16 %v158, %v157
    %v170 = vpack.c.b16 %v160, %v159
    %v171 = vpack.c.b16 %v162, %v161
    %v172 = vpack.c.b16 %v164, %v163
    %181 = vmatpush.bf16.msra.mxu0 %v172
    %182 = vmatpush.bf16.msra.mxu0 %v171
    %183 = vmatpush.bf16.msra.mxu0 %v170
    %184 = vmatpush.bf16.msra.mxu0 %v169
    %185 = vmatpush.bf16.msra.mxu0 %v168
    %186 = vmatpush.bf16.msra.mxu0 %v167
    %187 = vmatpush.bf16.msra.mxu0 %v166
    %188 = vmatpush.bf16.msra.mxu0 %v165
    %189 = vmatmul.bf16.gmra.mxu0 %v117
    %v190 = vpop.f32.mrf.mxu0
    %v191 = vadd.f32 0.0, %v190
    %v192 = vpop.f32.mrf.mxu0
    %v193 = vadd.f32 0.0, %v192
    %194 = vmatmul.bf16.gmra.mxu0 %v118
    %v195 = vpop.f32.mrf.mxu0
    %v196 = vadd.f32 0.0, %v195
    %v197 = vpop.f32.mrf.mxu0
    %v198 = vadd.f32 0.0, %v197
    %199 = vmatmul.bf16.gmra.mxu0 %v119
    %v200 = vpop.f32.mrf.mxu0
    %v201 = vadd.f32 0.0, %v200
    %v202 = vpop.f32.mrf.mxu0
    %v203 = vadd.f32 0.0, %v202
    %204 = vmatmul.bf16.gmra.mxu0 %v120
    %v205 = vpop.f32.mrf.mxu0
    %v206 = vadd.f32 0.0, %v205
    %v207 = vpop.f32.mrf.mxu0
    %v208 = vadd.f32 0.0, %v207
    %209 = vmatmul.bf16.gmra.mxu0 %v121
    %v210 = vpop.f32.mrf.mxu0
    %v211 = vadd.f32 0.0, %v210
    %v212 = vpop.f32.mrf.mxu0
    %v213 = vadd.f32 0.0, %v212
    %214 = vmatmul.bf16.gmra.mxu0 %v122
    %v215 = vpop.f32.mrf.mxu0
    %v216 = vadd.f32 0.0, %v215
    %v217 = vpop.f32.mrf.mxu0
    %v218 = vadd.f32 0.0, %v217
    %219 = vmatmul.bf16.gmra.mxu0 %v123
    %v220 = vpop.f32.mrf.mxu0
    %v221 = vadd.f32 0.0, %v220
    %v222 = vpop.f32.mrf.mxu0
    %v223 = vadd.f32 0.0, %v222
    %224 = vmatmul.bf16.gmra.mxu0 %v124
    %v225 = vpop.f32.mrf.mxu0
    %v226 = vadd.f32 0.0, %v225
    %v227 = vpop.f32.mrf.mxu0
    %v228 = vadd.f32 0.0, %v227
    %229 = vdwg.mxu0
    %v230 = vadd.f32 %v37, %v191
    %v231 = vadd.f32 %v38, %v193
    %v232 = vadd.f32 %v39, %v196
    %v233 = vadd.f32 %v40, %v198
    %v234 = vadd.f32 %v41, %v201
    %v235 = vadd.f32 %v42, %v203
    %v236 = vadd.f32 %v43, %v206
    %v237 = vadd.f32 %v44, %v208
    %v238 = vadd.f32 %v45, %v211
    %v239 = vadd.f32 %v46, %v213
    %v240 = vadd.f32 %v47, %v216
    %v241 = vadd.f32 %v48, %v218
    %v242 = vadd.f32 %v49, %v221
    %v243 = vadd.f32 %v50, %v223
    %v244 = vadd.f32 %v51, %v226
    %v245 = vadd.f32 %v52, %v228
    %246 = vst [vmem:[#allocation2] sm:$0xff] %v230
    %247 = vst [vmem:[#allocation2 + $0x8] sm:$0xff] %v231
    %248 = vst [vmem:[#allocation2 + $0x10] sm:$0xff] %v232
    %249 = vst [vmem:[#allocation2 + $0x18] sm:$0xff] %v233
    %250 = vst [vmem:[#allocation2 + $0x20] sm:$0xff] %v234
    %251 = vst [vmem:[#allocation2 + $0x28] sm:$0xff] %v235
    %252 = vst [vmem:[#allocation2 + $0x30] sm:$0xff] %v236
    %253 = vst [vmem:[#allocation2 + $0x38] sm:$0xff] %v237
    %254 = vst [vmem:[#allocation2 + $0x40] sm:$0xff] %v238
    %255 = vst [vmem:[#allocation2 + $0x48] sm:$0xff] %v239
    %256 = vst [vmem:[#allocation2 + $0x50] sm:$0xff] %v240
    %257 = vst [vmem:[#allocation2 + $0x58] sm:$0xff] %v241
    %258 = vst [vmem:[#allocation2 + $0x60] sm:$0xff] %v242
    %259 = vst [vmem:[#allocation2 + $0x68] sm:$0xff] %v243
    %260 = vst [vmem:[#allocation2 + $0x70] sm:$0xff] %v244
    %261 = vst [vmem:[#allocation2 + $0x78] sm:$0xff] %v245
    // Predicated region
    $region18: #{dhcn_forward.3} parent=1 // pred_check
      %p262 = pneg %p17
    $region19: #{dhcn_forward.3} parent=1 // pred_check_branch
      %264 = sbr.rel (%p262) target = $region21
    $region20: #{dhcn_forward.3} parent=1 // pred_region
      %v265 = vld [vmem:[#allocation2] sm:$0xff]
      %v266 = vld [vmem:[#allocation2 + $0x8] sm:$0xff]
      %v267 = vld [vmem:[#allocation2 + $0x10] sm:$0xff]
      %v268 = vld [vmem:[#allocation2 + $0x18] sm:$0xff]
      %v269 = vld [vmem:[#allocation2 + $0x20] sm:$0xff]
      %v270 = vld [vmem:[#allocation2 + $0x28] sm:$0xff]
      %v271 = vld [vmem:[#allocation2 + $0x30] sm:$0xff]
      %v272 = vld [vmem:[#allocation2 + $0x38] sm:$0xff]
      %v273 = vld [vmem:[#allocation2 + $0x40] sm:$0xff]
      %v274 = vld [vmem:[#allocation2 + $0x48] sm:$0xff]
      %v275 = vld [vmem:[#allocation2 + $0x50] sm:$0xff]
      %v276 = vld [vmem:[#allocation2 + $0x58] sm:$0xff]
      %v277 = vld [vmem:[#allocation2 + $0x60] sm:$0xff]
      %v278 = vld [vmem:[#allocation2 + $0x68] sm:$0xff]
      %v279 = vld [vmem:[#allocation2 + $0x70] sm:$0xff]
      %v280 = vld [vmem:[#allocation2 + $0x78] sm:$0xff]
      %v281 = vpack.c.bf16 %v265, %v265
      %v282 = vpack.c.bf16 %v266, %v266
      %v283 = vpack.c.bf16 %v267, %v267
      %v284 = vpack.c.bf16 %v268, %v268
      %v285 = vpack.c.bf16 %v269, %v269
      %v286 = vpack.c.bf16 %v270, %v270
      %v287 = vpack.c.bf16 %v271, %v271
      %v288 = vpack.c.bf16 %v272, %v272
      %v289 = vpack.c.bf16 %v273, %v273
      %v290 = vpack.c.bf16 %v274, %v274
      %v291 = vpack.c.bf16 %v275, %v275
      %v292 = vpack.c.bf16 %v276, %v276
      %v293 = vpack.c.bf16 %v277, %v277
      %v294 = vpack.c.bf16 %v278, %v278
      %v295 = vpack.c.bf16 %v279, %v279
      %v296 = vpack.c.bf16 %v280, %v280
      %297 = vst [vmem:[#allocation3] sm:$0xf] %v281
      %298 = vst [vmem:[#allocation3 + $0x4] sm:$0xf] %v282
      %299 = vst [vmem:[#allocation3 + $0x8] sm:$0xf] %v283
      %300 = vst [vmem:[#allocation3 + $0xc] sm:$0xf] %v284
      %301 = vst [vmem:[#allocation3 + $0x10] sm:$0xf] %v285
      %302 = vst [vmem:[#allocation3 + $0x14] sm:$0xf] %v286
      %303 = vst [vmem:[#allocation3 + $0x18] sm:$0xf] %v287
      %304 = vst [vmem:[#allocation3 + $0x1c] sm:$0xf] %v288
      %305 = vst [vmem:[#allocation3 + $0x20] sm:$0xf] %v289
      %306 = vst [vmem:[#allocation3 + $0x24] sm:$0xf] %v290
      %307 = vst [vmem:[#allocation3 + $0x28] sm:$0xf] %v291
      %308 = vst [vmem:[#allocation3 + $0x2c] sm:$0xf] %v292
      %309 = vst [vmem:[#allocation3 + $0x30] sm:$0xf] %v293
      %310 = vst [vmem:[#allocation3 + $0x34] sm:$0xf] %v294
      %311 = vst [vmem:[#allocation3 + $0x38] sm:$0xf] %v295
      %312 = vst [vmem:[#allocation3 + $0x3c] sm:$0xf] %v296
      %v313 = vld [vmem:[%s2] sm:$0xff]
      %v314 = vld [vmem:[%s2 + $0x8] sm:$0xff]
      %v315 = vld [vmem:[%s2 + $0x10] sm:$0xff]
      %v316 = vld [vmem:[%s2 + $0x18] sm:$0xff]
      %v317 = vld [vmem:[%s2 + $0x20] sm:$0xff]
      %v318 = vld [vmem:[%s2 + $0x28] sm:$0xff]
      %v319 = vld [vmem:[%s2 + $0x30] sm:$0xff]
      %v320 = vld [vmem:[%s2 + $0x38] sm:$0xff]
      %v321 = vld [vmem:[%s2 + $0x40] sm:$0xff]
      %v322 = vld [vmem:[%s2 + $0x48] sm:$0xff]
      %v323 = vld [vmem:[%s2 + $0x50] sm:$0xff]
      %v324 = vld [vmem:[%s2 + $0x58] sm:$0xff]
      %v325 = vld [vmem:[%s2 + $0x60] sm:$0xff]
      %v326 = vld [vmem:[%s2 + $0x68] sm:$0xff]
      %v327 = vld [vmem:[%s2 + $0x70] sm:$0xff]
      %v328 = vld [vmem:[%s2 + $0x78] sm:$0xff]
      %v329 = vld [vmem:[#allocation2] sm:$0xff]
      %v330 = vld [vmem:[#allocation2 + $0x8] sm:$0xff]
      %v331 = vld [vmem:[#allocation2 + $0x10] sm:$0xff]
      %v332 = vld [vmem:[#allocation2 + $0x18] sm:$0xff]
      %v333 = vld [vmem:[#allocation2 + $0x20] sm:$0xff]
      %v334 = vld [vmem:[#allocation2 + $0x28] sm:$0xff]
      %v335 = vld [vmem:[#allocation2 + $0x30] sm:$0xff]
      %v336 = vld [vmem:[#allocation2 + $0x38] sm:$0xff]
      %v337 = vld [vmem:[#allocation2 + $0x40] sm:$0xff]
      %v338 = vld [vmem:[#allocation2 + $0x48] sm:$0xff]
      %v339 = vld [vmem:[#allocation2 + $0x50] sm:$0xff]
      %v340 = vld [vmem:[#allocation2 + $0x58] sm:$0xff]
      %v341 = vld [vmem:[#allocation2 + $0x60] sm:$0xff]
      %v342 = vld [vmem:[#allocation2 + $0x68] sm:$0xff]
      %v343 = vld [vmem:[#allocation2 + $0x70] sm:$0xff]
      %v344 = vld [vmem:[#allocation2 + $0x78] sm:$0xff]
      %v345 = vadd.f32 %v313, %v329
      %v346 = vadd.f32 %v314, %v330
      %v347 = vadd.f32 %v315, %v331
      %v348 = vadd.f32 %v316, %v332
      %v349 = vadd.f32 %v317, %v333
      %v350 = vadd.f32 %v318, %v334
      %v351 = vadd.f32 %v319, %v335
      %v352 = vadd.f32 %v320, %v336
      %v353 = vadd.f32 %v321, %v337
      %v354 = vadd.f32 %v322, %v338
      %v355 = vadd.f32 %v323, %v339
      %v356 = vadd.f32 %v324, %v340
      %v357 = vadd.f32 %v325, %v341
      %v358 = vadd.f32 %v326, %v342
      %v359 = vadd.f32 %v327, %v343
      %v360 = vadd.f32 %v328, %v344
      %361 = vst [vmem:[%s4] sm:$0xff] %v345
      %362 = vst [vmem:[%s4 + $0x8] sm:$0xff] %v346
      %363 = vst [vmem:[%s4 + $0x10] sm:$0xff] %v347
      %364 = vst [vmem:[%s4 + $0x18] sm:$0xff] %v348
      %365 = vst [vmem:[%s4 + $0x20] sm:$0xff] %v349
      %366 = vst [vmem:[%s4 + $0x28] sm:$0xff] %v350
      %367 = vst [vmem:[%s4 + $0x30] sm:$0xff] %v351
      %368 = vst [vmem:[%s4 + $0x38] sm:$0xff] %v352
      %369 = vst [vmem:[%s4 + $0x40] sm:$0xff] %v353
      %370 = vst [vmem:[%s4 + $0x48] sm:$0xff] %v354
      %371 = vst [vmem:[%s4 + $0x50] sm:$0xff] %v355
      %372 = vst [vmem:[%s4 + $0x58] sm:$0xff] %v356
      %373 = vst [vmem:[%s4 + $0x60] sm:$0xff] %v357
      %374 = vst [vmem:[%s4 + $0x68] sm:$0xff] %v358
      %375 = vst [vmem:[%s4 + $0x70] sm:$0xff] %v359
      %376 = vst [vmem:[%s4 + $0x78] sm:$0xff] %v360
    $region21: #{dhcn_forward.3} parent=1 // pred_fallthru
      _
    // Predicated region
    $region22: #{dhcn_forward.3} parent=1 // pred_check
      _
    $region23: #{dhcn_forward.3} parent=1 // pred_check_branch
      %378 = sbr.rel (0) target = $region25
    $region24: #{dhcn_forward.3} parent=1 // pred_region
      %380 = vsyncadd [#allocation4], 0
      %s381 = sshll.u32 [#allocation3], 4
      %s382 = int_to_ptr.vmem [resolvable:$true] %s381
      %s383 = sshll.u32 %s3, 4
      %s384 = int_to_ptr.hbm [resolvable:$true] %s383
      %389 = dma.vmem_to_hbm [thread:$0]  %s382, 1024, %s384, [#allocation4], 64, 64, 4
    $region25: #{dhcn_forward.3} parent=1 // pred_fallthru
      _
    // Predicated region
    $region26: #{dhcn_forward.3} parent=1 // pred_check
      _
    $region27: #{dhcn_forward.3} parent=1 // pred_check_branch
      %391 = sbr.rel (0) target = $region29
    $region28: #{dhcn_forward.3} parent=1 // pred_region
      _
    $region29: #{dhcn_forward.3} parent=1 // pred_fallthru
      _
    // Predicated region
    $region30: #{dhcn_forward.3} parent=1 // pred_check
      _
    $region31: #{dhcn_forward.3} parent=1 // pred_check_branch
      %393 = sbr.rel (0) target = $region33
    $region32: #{dhcn_forward.3} parent=1 // pred_region
      %395 = dma.done [#allocation4], 1024
    $region33: #{dhcn_forward.3} parent=1 // pred_fallthru
      _
    // Predicated region
    $region34: #{dhcn_forward.3} parent=1 // pred_check
      _
    $region35: #{dhcn_forward.3} parent=1 // pred_check_branch
      %397 = sbr.rel (0) target = $region37
    $region36: #{dhcn_forward.3} parent=1 // pred_region
      _
    $region37: #{dhcn_forward.3} parent=1 // pred_fallthru
      _
    %398 = vsyncpa [#allocation4], 1

</llo_original>
